<compile_context>
chip_gen: v5e
topology: v5e:2x2
jax: 0.10.0
libtpu: 0.0.40
codegen_flags: <defaults>
</compile_context>

<pallas_src>
import functools

import jax
import jax.numpy as jnp
from jax.experimental import pallas as pl
from jax.experimental.pallas import tpu as pltpu

MiB = 1024 * 1024


def _round_up(x, m):
    return (x + m - 1) // m * m


# --------------------------------------------------------------------------- #
# Kernel                                                                       #
# --------------------------------------------------------------------------- #
def _ffn_kernel(x_ref, w1_ref, b1_ref, w2_ref, b2_ref, o_ref, acc_ref):
    # x_ref:  (tm, dim)   w1_ref: (dim, tk)   b1_ref: (1, tk)
    # w2_ref: (tk, dim)   b2_ref: (1, dim)
    # o_ref:  (tm, dim)   acc_ref: (tm, dim) f32 scratch, resident across k
    k = pl.program_id(1)

    @pl.when(k == 0)
    def _():
        acc_ref[...] = jnp.zeros_like(acc_ref)

    # First matmul (MXU) + bias + ReLU on this hidden chunk, f32 accumulation.
    h = jnp.dot(x_ref[...], w1_ref[...], preferred_element_type=jnp.float32)
    h = jnp.maximum(h + b1_ref[...], 0.0)

    # Second matmul: this chunk's contribution into the f32 accumulator.
    acc_ref[...] += jnp.dot(
        h.astype(w2_ref.dtype), w2_ref[...], preferred_element_type=jnp.float32
    )

    @pl.when(k == pl.num_programs(1) - 1)
    def _():
        # Final bias add, cast, store.  Dropout (eval mode) == identity.
        o_ref[...] = (acc_ref[...] + b2_ref[...]).astype(o_ref.dtype)


# --------------------------------------------------------------------------- #
# Trace-time hardware / tiling helpers                                         #
# --------------------------------------------------------------------------- #
def _device_kind():
    try:
        return jax.devices()[0].device_kind.lower()
    except Exception:
        return ""


def _vmem_capacity_bytes(kind):
    try:
        return int(pltpu.get_tpu_info().vmem_capacity_bytes)
    except Exception:
        # Fall back to the device-kind string; conservative when unknown.
        if any(v in kind for v in ("v4", "v5", "v6")):
            return 128 * MiB
        return 64 * MiB


def _spec(shape, index_map, buffers=None):
    """BlockSpec with optional pipelining depth; falls back if unsupported."""
    if buffers is None or not hasattr(pl, "Buffered"):
        return pl.BlockSpec(shape, index_map)
    try:
        return pl.BlockSpec(shape, index_map, pipeline_mode=pl.Buffered(buffers))
    except TypeError:  # jax version without BlockSpec.pipeline_mode
        return pl.BlockSpec(shape, index_map)


def _vmem_estimate(tm, tk, dim, in_bytes, w_bytes, w_buffers=2, xo_buffers=2):
    return (
        xo_buffers * tm * dim * in_bytes           # x tile
        + xo_buffers * tm * dim * in_bytes         # out tile
        + w_buffers * (dim * tk + tk) * w_bytes    # W1 chunk + b1 chunk
        + w_buffers * tk * dim * w_bytes           # W2 chunk
        + 2 * dim * w_bytes                        # b2
        + tm * dim * 4                             # f32 accumulator scratch
        + tm * tk * 4                              # f32 h intermediate
        + tm * tk * w_bytes                        # h cast copy fed to 2nd matmul
        + 2 * MiB                                  # Mosaic internal scratch allowance
    )


def _choose_tm(m, tm_max, prefer_split):
    """Row tile: multiple of 128, <= tm_max, minimal padded rows; on two-TC
    chips (v7x) prefer grid_m >= 2 so the 'parallel' axis spans both cores."""
    m8 = _round_up(m, 8)
    if tm_max < 128:                       # explicit small-tile request
        return min(_round_up(tm_max, 8), m8)
    if m <= 128:                           # tiny row count: single small tile
        return m8
    tm_max = max(128, tm_max // 128 * 128)
    best_key, best_tm = None, 128
    for cand in range(128, tm_max + 1, 128):
        m_pad = _round_up(m, cand)
        grid_m = m_pad // cand
        miss_split = 1 if (prefer_split and grid_m < 2) else 0
        key = (miss_split, m_pad - m, -cand)
        if best_key is None or key < best_key:
            best_key, best_tm = key, cand
    return best_tm


# --------------------------------------------------------------------------- #
# Wrapper                                                                      #
# --------------------------------------------------------------------------- #
@functools.partial(jax.jit, static_argnames=("tm", "tk"))
def feed_forward(x, w1_t, b1, w2_t, b2, *, tm=None, tk=None):
    """x: (batch, seq, dim). Weights pre-transposed: w1_t (dim, hidden), w2_t (hidden, dim)."""
    batch, seq, dim = x.shape
    hidden = w1_t.shape[1]
    m = batch * seq

    in_bytes = jnp.dtype(x.dtype).itemsize
    w_bytes = jnp.dtype(w1_t.dtype).itemsize

    # ----- generation-aware budget / defaults (trace-time constants) --------
    kind = _device_kind()
    vmem_phys = _vmem_capacity_bytes(kind)
    if vmem_phys >= 128 * MiB:             # v5e / v6e: 128 MiB physical
        vmem_cap = 104 * MiB
    else:                                  # v7x: 64 MiB per TensorCore
        vmem_cap = min(48 * MiB, vmem_phys * 3 // 4)
    is_v7x = ("v7" in kind) or (vmem_phys < 100 * MiB)

    if tm is None:
        # v6e/v7x need tm >= ~512 to stay MXU-bound on the weight stream;
        # v5e's roofline (~240 FLOP/byte) is already crossed at 256.
        tm = 256 if "v5" in kind else 512
    tk_auto = tk is None
    if tk is None:
        tk = 512

    # ----- tile selection ----------------------------------------------------
    hidden128 = _round_up(hidden, 128)
    tm_eff = _choose_tm(m, tm, prefer_split=is_v7x)

    # Weights-resident fast path (auto mode): if W1+W2 (+ row tiles) fit the
    # budget, collapse k -> weights are fetched from HBM exactly once.
    if tk_auto and _vmem_estimate(tm_eff, hidden128, dim, in_bytes, w_bytes) <= vmem_cap:
        tk_eff = hidden128
    else:
        tk_eff = max(128, min(tk, hidden128) // 128 * 128)

    # Shrink until the estimate fits the generation budget (tk first, then tm).
    while _vmem_estimate(tm_eff, tk_eff, dim, in_bytes, w_bytes) > vmem_cap:
        if tk_eff > 128:
            tk_eff = max(128, _round_up(tk_eff // 2, 128))
        elif tm_eff > 128:
            tm_eff = max(128, tm_eff - 128)
        elif tm_eff > 8:
            tm_eff = max(8, tm_eff // 2)
        else:
            break
    # TODO(synk): for dim >= 8k on v7x, add an output-column (tn) grid axis so
    # tm can stay >= 256 without blowing the 64 MiB budget.

    m_pad = _round_up(m, tm_eff)
    hidden_pad = _round_up(hidden, tk_eff)
    grid_m = m_pad // tm_eff
    grid_k = hidden_pad // tk_eff

    # Pipelining depths: only when chunks are big enough to matter (also keeps
    # small-shape paths on plain BlockSpecs).
    w_chunk_bytes = 2 * dim * tk_eff * w_bytes
    w_buffers = None
    if (grid_k > 1 and not is_v7x and w_chunk_bytes >= 2 * MiB
            and _vmem_estimate(tm_eff, tk_eff, dim, in_bytes, w_bytes, 3) <= vmem_cap):
        w_buffers = 3                      # hide weight DMA at row-tile boundaries
    x_buffers = None
    if grid_k > 1 and tm_eff * dim * in_bytes >= 2 * MiB:
        x_buffers = 1                      # x is k-invariant; reclaim VMEM
    # TODO(synk): the output block is also k-invariant; single-buffer it too once
    # Buffered(1) on outputs is validated on the target jax version.

    # ----- pad operands (zero padding is a no-op for this FFN) --------------
    x2d = x.reshape(m, dim)
    if m_pad != m:
        x2d = jnp.pad(x2d, ((0, m_pad - m), (0, 0)))
    b1_2d = b1.reshape(1, hidden)
    b2_2d = b2.reshape(1, dim)
    if hidden_pad != hidden:
        w1_t = jnp.pad(w1_t, ((0, 0), (0, hidden_pad - hidden)))
        b1_2d = jnp.pad(b1_2d, ((0, 0), (0, hidden_pad - hidden)))
        w2_t = jnp.pad(w2_t, ((0, hidden_pad - hidden), (0, 0)))

    # ----- VMEM / cost hints -------------------------------------------------
    est = _vmem_estimate(tm_eff, tk_eff, dim, in_bytes, w_bytes, w_buffers or 2)
    vmem_limit = int(min(vmem_cap, max(2 * est, 32 * MiB)))

    weight_passes = 1 if grid_k == 1 else grid_m   # weights re-streamed per row tile
    cost = pl.CostEstimate(
        flops=4 * m_pad * dim * hidden_pad,
        transcendentals=0,
        bytes_accessed=int(
            m_pad * dim * in_bytes * 2
            + weight_passes * (2 * dim * hidden_pad + hidden_pad + dim) * w_bytes
        ),
    )

    out2d = pl.pallas_call(
        _ffn_kernel,
        out_shape=jax.ShapeDtypeStruct((m_pad, dim), x.dtype),
        grid_spec=pltpu.PrefetchScalarGridSpec(
            num_scalar_prefetch=0,
            grid=(grid_m, grid_k),                   # hidden (reduction) axis last
            in_specs=[
                _spec((tm_eff, dim), lambda i, k: (i, 0), x_buffers),   # x rows
                _spec((dim, tk_eff), lambda i, k: (0, k), w_buffers),   # W1 chunk
                _spec((1, tk_eff), lambda i, k: (0, k)),                # b1 chunk
                _spec((tk_eff, dim), lambda i, k: (k, 0), w_buffers),   # W2 chunk
                _spec((1, dim), lambda i, k: (0, 0)),                   # b2
            ],
            out_specs=pl.BlockSpec((tm_eff, dim), lambda i, k: (i, 0)),
            scratch_shapes=[pltpu.VMEM((tm_eff, dim), jnp.float32)],
        ),
        compiler_params=pltpu.CompilerParams(
            dimension_semantics=("parallel", "arbitrary"),
            vmem_limit_bytes=vmem_limit,
        ),
        cost_estimate=cost,
    )(x2d, w1_t, b1_2d, w2_t, b2_2d)

    return out2d[:m].reshape(batch, seq, dim)


# --------------------------------------------------------------------------- #
# Reference / test                                                             #
# --------------------------------------------------------------------------- #
def init_params(key, dim, hidden_dim, dtype=jnp.float32):
    """nn.Linear-style uniform init, weights pre-transposed for x @ W."""
    k1, k2, k3, k4 = jax.random.split(key, 4)
    bound1 = 1.0 / (dim ** 0.5)
    bound2 = 1.0 / (hidden_dim ** 0.5)
    w1_t = jax.random.uniform(k1, (dim, hidden_dim), dtype, -bound1, bound1)
    b1 = jax.random.uniform(k2, (hidden_dim,), dtype, -bound1, bound1)
    w2_t = jax.random.uniform(k3, (hidden_dim, dim), dtype, -bound2, bound2)
    b2 = jax.random.uniform(k4, (dim,), dtype, -bound2, bound2)
    return w1_t, b1, w2_t, b2


def _reference(x, w1_t, b1, w2_t, b2):
    return jnp.maximum(x @ w1_t + b1, 0.0) @ w2_t + b2


if __name__ == "__main__":
    # Small but lane-dense shapes (dim/hidden multiples of 128).
    batch, seq, dim, hidden_dim = 2, 8, 128, 256

    key = jax.random.PRNGKey(0)
    kx, kp = jax.random.split(key)
    x = jax.random.normal(kx, (batch, seq, dim), jnp.float32)
    w1_t, b1, w2_t, b2 = init_params(kp, dim, hidden_dim)
    ref = _reference(x, w1_t, b1, w2_t, b2)

    # 1) f32, auto tiles (weights-resident fast path, grid_k == 1).
    out = feed_forward(x, w1_t, b1, w2_t, b2)
    jax.block_until_ready(out)
    assert out.shape == (batch, seq, dim)
    assert jnp.allclose(out, ref, atol=1e-5, rtol=1e-5)

    # 2) Odd row count + forced multi-tile grid (row padding + k-accumulation).
    x_odd = jax.random.normal(jax.random.PRNGKey(1), (3, 5, dim), jnp.float32)
    out_odd = feed_forward(x_odd, w1_t, b1, w2_t, b2, tm=8, tk=128)
    jax.block_until_ready(out_odd)
    ref_odd = _reference(x_odd, w1_t, b1, w2_t, b2)
    assert jnp.allclose(out_odd, ref_odd, atol=1e-5, rtol=1e-5)

    # 3) bf16 matmuls with f32 accumulation (production mode).
    out_bf16 = feed_forward(
        x.astype(jnp.bfloat16),
        w1_t.astype(jnp.bfloat16), b1.astype(jnp.bfloat16),
        w2_t.astype(jnp.bfloat16), b2.astype(jnp.bfloat16),
    )
    jax.block_until_ready(out_bf16)
    assert jnp.allclose(out_bf16.astype(jnp.float32), ref, atol=5e-2, rtol=1e-1)

    print("KERNEL_OK")
</pallas_src>

<mosaic_0001>
module attributes {stable_mosaic.version = 11 : i64} {
  func.func @_ffn_kernel(%arg0: i32, %arg1: i32, %arg2: memref<16x128xf32, #tpu.memory_space<vmem>>, %arg3: memref<128x256xf32, #tpu.memory_space<vmem>>, %arg4: memref<1x256xf32, #tpu.memory_space<vmem>>, %arg5: memref<256x128xf32, #tpu.memory_space<vmem>>, %arg6: memref<1x128xf32, #tpu.memory_space<vmem>>, %arg7: memref<16x128xf32, #tpu.memory_space<vmem>>, %arg8: memref<16x128xf32, #tpu.memory_space<vmem>>) attributes {dimension_semantics = [#tpu.dimension_semantics<parallel>, #tpu.dimension_semantics<arbitrary>], iteration_bounds = array<i64: 1, 1>, scalar_prefetch = 0 : i64, scratch_operands = 1 : i64, tpu.core_type = #tpu.core_type<tc>, window_params = [{transform_indices = @transform_0, window_bounds = array<i64: 16, 128>}, {transform_indices = @transform_1, window_bounds = array<i64: 128, 256>}, {transform_indices = @transform_2, window_bounds = array<i64: 1, 256>}, {transform_indices = @transform_3, window_bounds = array<i64: 256, 128>}, {pipeline_mode = #tpu.pipeline_mode<synchronous>, transform_indices = @transform_4, window_bounds = array<i64: 1, 128>}, {transform_indices = @transform_5, window_bounds = array<i64: 16, 128>}]} {
    %c0_i32 = arith.constant 0 : i32
    %0 = arith.cmpi eq, %arg1, %c0_i32 : i32
    %1 = arith.extui %0 : i1 to i32
    %c0_i32_0 = arith.constant 0 : i32
    %2 = arith.cmpi ne, %1, %c0_i32_0 : i32
    scf.if %2 {
      %cst_16 = arith.constant 0.000000e+00 : f32
      %19 = vector.broadcast %cst_16 : f32 to vector<16x128xf32>
      %c0_17 = arith.constant 0 : index
      %c0_18 = arith.constant 0 : index
      %20 = vector.load %arg8[%c0_17, %c0_18] : memref<16x128xf32, #tpu.memory_space<vmem>>, vector<16x128xf32>
      tpu.vector_store %arg8[%c0_17, %c0_18], %19 {strides = array<i32>} : memref<16x128xf32, #tpu.memory_space<vmem>>, vector<16x128xf32>,
    } else {
    }
    %c0 = arith.constant 0 : index
    %c0_1 = arith.constant 0 : index
    %3 = vector.load %arg2[%c0, %c0_1] : memref<16x128xf32, #tpu.memory_space<vmem>>, vector<16x128xf32>
    %c0_2 = arith.constant 0 : index
    %c0_3 = arith.constant 0 : index
    %4 = vector.load %arg3[%c0_2, %c0_3] : memref<128x256xf32, #tpu.memory_space<vmem>>, vector<128x256xf32>
    %cst = arith.constant dense<0.000000e+00> : vector<16x256xf32>
    %5 = tpu.matmul %3, %4, %cst {dimension_numbers = #tpu.dot_dimension_numbers<[1], [0], [0], [1], [0, 0, 1, 1], [], []>} : vector<16x128xf32>, vector<128x256xf32>, vector<16x256xf32> -> vector<16x256xf32>
    %c0_4 = arith.constant 0 : index
    %c0_5 = arith.constant 0 : index
    %6 = vector.load %arg4[%c0_4, %c0_5] : memref<1x256xf32, #tpu.memory_space<vmem>>, vector<1x256xf32>
    %7 = vector.broadcast %6 : vector<1x256xf32> to vector<16x256xf32>
    %8 = arith.addf %5, %7 : vector<16x256xf32>
    %cst_6 = arith.constant 0.000000e+00 : f32
    %9 = vector.broadcast %cst_6 : f32 to vector<16x256xf32>
    %10 = arith.maximumf %8, %9 : vector<16x256xf32>
    %c0_7 = arith.constant 0 : index
    %c0_8 = arith.constant 0 : index
    %11 = vector.load %arg8[%c0_7, %c0_8] : memref<16x128xf32, #tpu.memory_space<vmem>>, vector<16x128xf32>
    %c0_9 = arith.constant 0 : index
    %c0_10 = arith.constant 0 : index
    %12 = vector.load %arg5[%c0_9, %c0_10] : memref<256x128xf32, #tpu.memory_space<vmem>>, vector<256x128xf32>
    %cst_11 = arith.constant dense<0.000000e+00> : vector<16x128xf32>
    %13 = tpu.matmul %10, %12, %cst_11 {dimension_numbers = #tpu.dot_dimension_numbers<[1], [0], [0], [1], [0, 0, 1, 1], [], []>} : vector<16x256xf32>, vector<256x128xf32>, vector<16x128xf32> -> vector<16x128xf32>
    %14 = arith.addf %11, %13 : vector<16x128xf32>
    %c0_12 = arith.constant 0 : index
    %c0_13 = arith.constant 0 : index
    %15 = vector.load %arg8[%c0_12, %c0_13] : memref<16x128xf32, #tpu.memory_space<vmem>>, vector<16x128xf32>
    tpu.vector_store %arg8[%c0_12, %c0_13], %14 {strides = array<i32>} : memref<16x128xf32, #tpu.memory_space<vmem>>, vector<16x128xf32>,
    %c0_i32_14 = arith.constant 0 : i32
    %16 = arith.cmpi eq, %arg1, %c0_i32_14 : i32
    %17 = arith.extui %16 : i1 to i32
    %c0_i32_15 = arith.constant 0 : i32
    %18 = arith.cmpi ne, %17, %c0_i32_15 : i32
    scf.if %18 {
      %c0_16 = arith.constant 0 : index
      %c0_17 = arith.constant 0 : index
      %19 = vector.load %arg8[%c0_16, %c0_17] : memref<16x128xf32, #tpu.memory_space<vmem>>, vector<16x128xf32>
      %c0_18 = arith.constant 0 : index
      %c0_19 = arith.constant 0 : index
      %20 = vector.load %arg6[%c0_18, %c0_19] : memref<1x128xf32, #tpu.memory_space<vmem>>, vector<1x128xf32>
      %21 = vector.broadcast %20 : vector<1x128xf32> to vector<16x128xf32>
      %22 = arith.addf %19, %21 : vector<16x128xf32>
      %c0_20 = arith.constant 0 : index
      %c0_21 = arith.constant 0 : index
      %23 = vector.load %arg7[%c0_20, %c0_21] : memref<16x128xf32, #tpu.memory_space<vmem>>, vector<16x128xf32>
      tpu.vector_store %arg7[%c0_20, %c0_21], %22 {strides = array<i32>} : memref<16x128xf32, #tpu.memory_space<vmem>>, vector<16x128xf32>,
    } else {
    }
    return
  }
  func.func @transform_0(%arg0: i32, %arg1: i32) -> (i32, i32) {
    %c0_i32 = arith.constant 0 : i32
    %c0_i32_0 = arith.constant 0 : i32
    return %arg0, %c0_i32 : i32, i32
  }
  func.func @transform_1(%arg0: i32, %arg1: i32) -> (i32, i32) {
    %c0_i32 = arith.constant 0 : i32
    %c0_i32_0 = arith.constant 0 : i32
    return %c0_i32, %arg1 : i32, i32
  }
  func.func @transform_2(%arg0: i32, %arg1: i32) -> (i32, i32) {
    %c0_i32 = arith.constant 0 : i32
    %c0_i32_0 = arith.constant 0 : i32
    return %c0_i32, %arg1 : i32, i32
  }
  func.func @transform_3(%arg0: i32, %arg1: i32) -> (i32, i32) {
    %c0_i32 = arith.constant 0 : i32
    %c0_i32_0 = arith.constant 0 : i32
    return %arg1, %c0_i32 : i32, i32
  }
  func.func @transform_4(%arg0: i32, %arg1: i32) -> (i32, i32) {
    %c0_i32 = arith.constant 0 : i32
    %c0_i32_0 = arith.constant 0 : i32
    %c0_i32_1 = arith.constant 0 : i32
    return %c0_i32, %c0_i32_0 : i32, i32
  }
  func.func @transform_5(%arg0: i32, %arg1: i32) -> (i32, i32) {
    %c0_i32 = arith.constant 0 : i32
    %c0_i32_0 = arith.constant 0 : i32
    return %arg0, %c0_i32 : i32, i32
  }
}

</mosaic_0001>

<llo_original>
// kernel: feed_forward.1
$region0: #{feed_forward.1}
  #allocation0 [shape = 'u32[]', space=smem, size = 0x4, offset = 0x4, fixed_abs, tag = 'smem constant byte address 0x4 - core index']
  #allocation1 [shape = 'u32[72,128]{1,0:T(1,128)}', space=vmem, size = 0x9000, scoped, tag = 'internal scratch']
  #allocation2 [shape = 'f32[16,128]{1,0:T(8,128)}', space=vmem, size = 0x2000, scoped, tag = 'scratch operand']
  %s0 = inlined_call_operand.hbm [shape: f32[16,128], index: 0, kind: input, shape index: {}]
  %s1 = inlined_call_operand.hbm [shape: f32[128,256], index: 1, kind: input, shape index: {}]
  %s2 = inlined_call_operand.vmem [shape: f32[1,256], index: 2, kind: input, shape index: {}]
  %s3 = inlined_call_operand.hbm [shape: f32[256,128], index: 3, kind: input, shape index: {}]
  %s4 = inlined_call_operand.vmem [shape: f32[1,128], index: 4, kind: input, shape index: {}]
  %s5 = inlined_call_operand.hbm [shape: f32[16,128], index: 5, kind: output, shape index: {}]
  %s6 = sld [smem:[#allocation0]]
  $region50: #{feed_forward.1} parent=0
    _
  %s8 = ssub.s32 1, %s6
  %s9 = scalar_select 0, %s8, %s6
  $region1: #{feed_forward.1} parent=0
    #allocation3 [shape = 'u8[8192]{0}', space=vmem, size = 0x2000, scoped, tag = 'input window, operand 0, single buffered']
    #allocation4 [shape = 's32[1]{0}', space=sflag, size = 0x4, scoped, tag = 'scoped memory for feed_forward.1']
    #allocation5 [shape = 's32[1]{0}', space=sflag, size = 0x4, scoped, tag = 'scoped memory for feed_forward.1']
    #allocation6 [shape = 'u8[131072]{0}', space=vmem, size = 0x20000, scoped, tag = 'input window, operand 1, single buffered']
    #allocation7 [shape = 's32[1]{0}', space=sflag, size = 0x4, scoped, tag = 'scoped memory for feed_forward.1']
    #allocation8 [shape = 'u8[131072]{0}', space=vmem, size = 0x20000, scoped, tag = 'input window, operand 3, single buffered']
    #allocation9 [shape = 'u8[8192]{0}', space=vmem, size = 0x2000, scoped, tag = 'output window, operand 0, single buffered']
    %10 = vsyncpa [#allocation4], 0
    %11 = vsyncpa [#allocation7], 0
    %12 = vsyncpa [#allocation5], 0
    // Predicated region
    $region2: #{feed_forward.1} parent=1 // pred_check
      _
    $region3: #{feed_forward.1} parent=1 // pred_check_branch
      %14 = sbr.rel (0) target = $region5
    $region4: #{feed_forward.1} parent=1 // pred_region
      %16 = vsyncadd [#allocation4], 0
      %s17 = sshll.u32 %s0, 4
      %s18 = int_to_ptr.hbm [resolvable:$true] %s17
      %s19 = sshll.u32 [#allocation3], 4
      %s20 = int_to_ptr.vmem [resolvable:$true] %s19
      %25 = dma.hbm_to_vmem [thread:$0]  %s18, 256, %s20, [#allocation4], 128, 128, 8
    $region5: #{feed_forward.1} parent=1 // pred_fallthru
      _
    // Predicated region
    $region6: #{feed_forward.1} parent=1 // pred_check
      _
    $region7: #{feed_forward.1} parent=1 // pred_check_branch
      %27 = sbr.rel (0) target = $region9
    $region8: #{feed_forward.1} parent=1 // pred_region
      %29 = vsyncadd [#allocation7], 0
      %s30 = sshll.u32 %s1, 4
      %s31 = int_to_ptr.hbm [resolvable:$true] %s30
      %s32 = sshll.u32 [#allocation6], 4
      %s33 = int_to_ptr.vmem [resolvable:$true] %s32
      %38 = dma.hbm_to_vmem [thread:$0]  %s31, 4096, %s33, [#allocation7], 256, 256, 16
    $region9: #{feed_forward.1} parent=1 // pred_fallthru
      _
    // Predicated region
    $region10: #{feed_forward.1} parent=1 // pred_check
      _
    $region11: #{feed_forward.1} parent=1 // pred_check_branch
      %40 = sbr.rel (0) target = $region13
    $region12: #{feed_forward.1} parent=1 // pred_region
      _
    $region13: #{feed_forward.1} parent=1 // pred_fallthru
      _
    // Predicated region
    $region14: #{feed_forward.1} parent=1 // pred_check
      _
    $region15: #{feed_forward.1} parent=1 // pred_check_branch
      %42 = sbr.rel (0) target = $region17
    $region16: #{feed_forward.1} parent=1 // pred_region
      %44 = vsyncadd [#allocation7], 0
      %s45 = sshll.u32 %s3, 4
      %s46 = int_to_ptr.hbm [resolvable:$true] %s45
      %s47 = sshll.u32 [#allocation8], 4
      %s48 = int_to_ptr.vmem [resolvable:$true] %s47
      %53 = dma.hbm_to_vmem [thread:$0]  %s46, 4096, %s48, [#allocation7], 128, 128, 8
    $region17: #{feed_forward.1} parent=1 // pred_fallthru
      _
    // Predicated region
    $region18: #{feed_forward.1} parent=1 // pred_check
      _
    $region19: #{feed_forward.1} parent=1 // pred_check_branch
      %55 = sbr.rel (0) target = $region21
    $region20: #{feed_forward.1} parent=1 // pred_region
      _
    $region21: #{feed_forward.1} parent=1 // pred_fallthru
      _
    // Predicated region
    $region22: #{feed_forward.1} parent=1 // pred_check
      _
    $region23: #{feed_forward.1} parent=1 // pred_check_branch
      %57 = sbr.rel (0) target = $region25
    $region24: #{feed_forward.1} parent=1 // pred_region
      %59 = dma.done [#allocation4], 256
    $region25: #{feed_forward.1} parent=1 // pred_fallthru
      _
    // Predicated region
    $region26: #{feed_forward.1} parent=1 // pred_check
      _
    $region27: #{feed_forward.1} parent=1 // pred_check_branch
      %61 = sbr.rel (0) target = $region29
    $region28: #{feed_forward.1} parent=1 // pred_region
      %63 = dma.done [#allocation7], 4096
    $region29: #{feed_forward.1} parent=1 // pred_fallthru
      _
    // Predicated region
    $region30: #{feed_forward.1} parent=1 // pred_check
      _
    $region31: #{feed_forward.1} parent=1 // pred_check_branch
      %65 = sbr.rel (0) target = $region33
    $region32: #{feed_forward.1} parent=1 // pred_region
      %67 = dma.done [#allocation7], 4096
    $region33: #{feed_forward.1} parent=1 // pred_fallthru
      _
    %p68 = scmp.eq.s32.totalorder 0, 0
    // Predicated region
    $region34: #{feed_forward.1} parent=1 // pred_check
      %p69 = pneg %p68
    $region35: #{feed_forward.1} parent=1 // pred_check_branch
      %71 = sbr.rel (%p69) target = $region37
    $region36: #{feed_forward.1} parent=1 // pred_region
      %72 = vst [vmem:[#allocation2] sm:$0xff] 0.0
      %73 = vst [vmem:[#allocation2 + $0x8] sm:$0xff] 0.0
    $region37: #{feed_forward.1} parent=1 // pred_fallthru
      _
    %v74 = vld [vmem:[#allocation3] sm:$0xff]
    %v75 = vld [vmem:[#allocation3 + $0x8] sm:$0xff]
    %v76 = vld [vmem:[#allocation6] sm:$0xff]
    %v77 = vld [vmem:[#allocation6 + $0x8] sm:$0xff]
    %v78 = vld [vmem:[#allocation6 + $0x10] sm:$0xff]
    %v79 = vld [vmem:[#allocation6 + $0x18] sm:$0xff]
    %v80 = vld [vmem:[#allocation6 + $0x20] sm:$0xff]
    %v81 = vld [vmem:[#allocation6 + $0x28] sm:$0xff]
    %v82 = vld [vmem:[#allocation6 + $0x30] sm:$0xff]
    %v83 = vld [vmem:[#allocation6 + $0x38] sm:$0xff]
    %v84 = vld [vmem:[#allocation6 + $0x40] sm:$0xff]
    %v85 = vld [vmem:[#allocation6 + $0x48] sm:$0xff]
    %v86 = vld [vmem:[#allocation6 + $0x50] sm:$0xff]
    %v87 = vld [vmem:[#allocation6 + $0x58] sm:$0xff]
    %v88 = vld [vmem:[#allocation6 + $0x60] sm:$0xff]
    %v89 = vld [vmem:[#allocation6 + $0x68] sm:$0xff]
    %v90 = vld [vmem:[#allocation6 + $0x70] sm:$0xff]
    %v91 = vld [vmem:[#allocation6 + $0x78] sm:$0xff]
    %v92 = vld [vmem:[#allocation6 + $0x80] sm:$0xff]
    %v93 = vld [vmem:[#allocation6 + $0x88] sm:$0xff]
    %v94 = vld [vmem:[#allocation6 + $0x90] sm:$0xff]
    %v95 = vld [vmem:[#allocation6 + $0x98] sm:$0xff]
    %v96 = vld [vmem:[#allocation6 + $0xa0] sm:$0xff]
    %v97 = vld [vmem:[#allocation6 + $0xa8] sm:$0xff]
    %v98 = vld [vmem:[#allocation6 + $0xb0] sm:$0xff]
    %v99 = vld [vmem:[#allocation6 + $0xb8] sm:$0xff]
    %v100 = vld [vmem:[#allocation6 + $0xc0] sm:$0xff]
    %v101 = vld [vmem:[#allocation6 + $0xc8] sm:$0xff]
    %v102 = vld [vmem:[#allocation6 + $0xd0] sm:$0xff]
    %v103 = vld [vmem:[#allocation6 + $0xd8] sm:$0xff]
    %v104 = vld [vmem:[#allocation6 + $0xe0] sm:$0xff]
    %v105 = vld [vmem:[#allocation6 + $0xe8] sm:$0xff]
    %v106 = vld [vmem:[#allocation6 + $0xf0] sm:$0xff]
    %v107 = vld [vmem:[#allocation6 + $0xf8] sm:$0xff]
    %v108 = vld [vmem:[%s2] sm:$0x3]
    %v110 = vperm.slane %v108, 0
    %v111 = vperm.slane %v108, 1
    %114 = vmatpush.msra.mxu0 %v106
    %115 = vmatpush.msra.mxu0 %v104
    %116 = vmatpush.msra.mxu0 %v102
    %117 = vmatpush.msra.mxu0 %v100
    %118 = vmatpush.msra.mxu0 %v98
    %119 = vmatpush.msra.mxu0 %v96
    %120 = vmatpush.msra.mxu0 %v94
    %121 = vmatpush.msra.mxu0 %v92
    %122 = vmatpush.msra.mxu0 %v90
    %123 = vmatpush.msra.mxu0 %v88
    %124 = vmatpush.msra.mxu0 %v86
    %125 = vmatpush.msra.mxu0 %v84
    %126 = vmatpush.msra.mxu0 %v82
    %127 = vmatpush.msra.mxu0 %v80
    %128 = vmatpush.msra.mxu0 %v78
    %129 = vmatpush.msra.mxu0 %v76
    %130 = vmatmul.f32.gmra.mxu0 %v74
    %v131 = vpop.f32.mrf.mxu0
    %v132 = vadd.f32 %v110, %v131
    %133 = vmatmul.f32.gmra.mxu0 %v75
    %v134 = vpop.f32.mrf.mxu0
    %v135 = vadd.f32 %v110, %v134
    %136 = vdwg.mxu0
    %137 = vmatpush.msra.mxu0 %v107
    %138 = vmatpush.msra.mxu0 %v105
    %139 = vmatpush.msra.mxu0 %v103
    %140 = vmatpush.msra.mxu0 %v101
    %141 = vmatpush.msra.mxu0 %v99
    %142 = vmatpush.msra.mxu0 %v97
    %143 = vmatpush.msra.mxu0 %v95
    %144 = vmatpush.msra.mxu0 %v93
    %145 = vmatpush.msra.mxu0 %v91
    %146 = vmatpush.msra.mxu0 %v89
    %147 = vmatpush.msra.mxu0 %v87
    %148 = vmatpush.msra.mxu0 %v85
    %149 = vmatpush.msra.mxu0 %v83
    %150 = vmatpush.msra.mxu0 %v81
    %151 = vmatpush.msra.mxu0 %v79
    %152 = vmatpush.msra.mxu0 %v77
    %153 = vmatmul.f32.gmra.mxu0 %v74
    %v154 = vpop.f32.mrf.mxu0
    %v155 = vadd.f32 %v111, %v154
    %156 = vmatmul.f32.gmra.mxu0 %v75
    %v157 = vpop.f32.mrf.mxu0
    %v158 = vadd.f32 %v111, %v157
    %159 = vdwg.mxu0
    %v160 = vmax.f32 %v132, 0.0
    %v161 = vmax.f32 %v155, 0.0
    %v162 = vmax.f32 %v135, 0.0
    %v163 = vmax.f32 %v158, 0.0
    %v164 = vld [vmem:[#allocation2] sm:$0xff]
    %v165 = vld [vmem:[#allocation2 + $0x8] sm:$0xff]
    %v166 = vld [vmem:[#allocation8] sm:$0xff]
    %v167 = vld [vmem:[#allocation8 + $0x8] sm:$0xff]
    %v168 = vld [vmem:[#allocation8 + $0x10] sm:$0xff]
    %v169 = vld [vmem:[#allocation8 + $0x18] sm:$0xff]
    %v170 = vld [vmem:[#allocation8 + $0x20] sm:$0xff]
    %v171 = vld [vmem:[#allocation8 + $0x28] sm:$0xff]
    %v172 = vld [vmem:[#allocation8 + $0x30] sm:$0xff]
    %v173 = vld [vmem:[#allocation8 + $0x38] sm:$0xff]
    %v174 = vld [vmem:[#allocation8 + $0x40] sm:$0xff]
    %v175 = vld [vmem:[#allocation8 + $0x48] sm:$0xff]
    %v176 = vld [vmem:[#allocation8 + $0x50] sm:$0xff]
    %v177 = vld [vmem:[#allocation8 + $0x58] sm:$0xff]
    %v178 = vld [vmem:[#allocation8 + $0x60] sm:$0xff]
    %v179 = vld [vmem:[#allocation8 + $0x68] sm:$0xff]
    %v180 = vld [vmem:[#allocation8 + $0x70] sm:$0xff]
    %v181 = vld [vmem:[#allocation8 + $0x78] sm:$0xff]
    %v182 = vld [vmem:[#allocation8 + $0x80] sm:$0xff]
    %v183 = vld [vmem:[#allocation8 + $0x88] sm:$0xff]
    %v184 = vld [vmem:[#allocation8 + $0x90] sm:$0xff]
    %v185 = vld [vmem:[#allocation8 + $0x98] sm:$0xff]
    %v186 = vld [vmem:[#allocation8 + $0xa0] sm:$0xff]
    %v187 = vld [vmem:[#allocation8 + $0xa8] sm:$0xff]
    %v188 = vld [vmem:[#allocation8 + $0xb0] sm:$0xff]
    %v189 = vld [vmem:[#allocation8 + $0xb8] sm:$0xff]
    %v190 = vld [vmem:[#allocation8 + $0xc0] sm:$0xff]
    %v191 = vld [vmem:[#allocation8 + $0xc8] sm:$0xff]
    %v192 = vld [vmem:[#allocation8 + $0xd0] sm:$0xff]
    %v193 = vld [vmem:[#allocation8 + $0xd8] sm:$0xff]
    %v194 = vld [vmem:[#allocation8 + $0xe0] sm:$0xff]
    %v195 = vld [vmem:[#allocation8 + $0xe8] sm:$0xff]
    %v196 = vld [vmem:[#allocation8 + $0xf0] sm:$0xff]
    %v197 = vld [vmem:[#allocation8 + $0xf8] sm:$0xff]
    %198 = vmatpush.msra.mxu0 %v181
    %199 = vmatpush.msra.mxu0 %v180
    %200 = vmatpush.msra.mxu0 %v179
    %201 = vmatpush.msra.mxu0 %v178
    %202 = vmatpush.msra.mxu0 %v177
    %203 = vmatpush.msra.mxu0 %v176
    %204 = vmatpush.msra.mxu0 %v175
    %205 = vmatpush.msra.mxu0 %v174
    %206 = vmatpush.msra.mxu0 %v173
    %207 = vmatpush.msra.mxu0 %v172
    %208 = vmatpush.msra.mxu0 %v171
    %209 = vmatpush.msra.mxu0 %v170
    %210 = vmatpush.msra.mxu0 %v169
    %211 = vmatpush.msra.mxu0 %v168
    %212 = vmatpush.msra.mxu0 %v167
    %213 = vmatpush.msra.mxu0 %v166
    %214 = vmatmul.f32.gmra.mxu0 %v160
    %v215 = vpop.f32.mrf.mxu0
    %v216 = vadd.f32 0.0, %v215
    %217 = vmatmul.f32.gmra.mxu0 %v162
    %v218 = vpop.f32.mrf.mxu0
    %v219 = vadd.f32 0.0, %v218
    %220 = vdwg.mxu0
    %221 = vmatpush.msra.mxu0 %v197
    %222 = vmatpush.msra.mxu0 %v196
    %223 = vmatpush.msra.mxu0 %v195
    %224 = vmatpush.msra.mxu0 %v194
    %225 = vmatpush.msra.mxu0 %v193
    %226 = vmatpush.msra.mxu0 %v192
    %227 = vmatpush.msra.mxu0 %v191
    %228 = vmatpush.msra.mxu0 %v190
    %229 = vmatpush.msra.mxu0 %v189
    %230 = vmatpush.msra.mxu0 %v188
    %231 = vmatpush.msra.mxu0 %v187
    %232 = vmatpush.msra.mxu0 %v186
    %233 = vmatpush.msra.mxu0 %v185
    %234 = vmatpush.msra.mxu0 %v184
    %235 = vmatpush.msra.mxu0 %v183
    %236 = vmatpush.msra.mxu0 %v182
    %237 = vmatmul.f32.gmra.mxu0 %v161
    %v238 = vpop.f32.mrf.mxu0
    %v239 = vadd.f32 %v216, %v238
    %240 = vmatmul.f32.gmra.mxu0 %v163
    %v241 = vpop.f32.mrf.mxu0
    %v242 = vadd.f32 %v219, %v241
    %243 = vdwg.mxu0
    %v244 = vadd.f32 %v164, %v239
    %v245 = vadd.f32 %v165, %v242
    %246 = vst [vmem:[#allocation2] sm:$0xff] %v244
    %247 = vst [vmem:[#allocation2 + $0x8] sm:$0xff] %v245
    // Predicated region
    $region38: #{feed_forward.1} parent=1 // pred_check
      %p248 = pneg %p68
    $region39: #{feed_forward.1} parent=1 // pred_check_branch
      %250 = sbr.rel (%p248) target = $region41
    $region40: #{feed_forward.1} parent=1 // pred_region
      %v251 = vld [vmem:[#allocation2] sm:$0xff]
      %v252 = vld [vmem:[#allocation2 + $0x8] sm:$0xff]
      %v253 = vld [vmem:[%s4] sm:$0x1]
      %v255 = vperm.slane %v253, 0
      %v257 = vadd.f32 %v251, %v255
      %v258 = vadd.f32 %v252, %v255
      %259 = vst [vmem:[#allocation9] sm:$0xff] %v257
      %260 = vst [vmem:[#allocation9 + $0x8] sm:$0xff] %v258
    $region41: #{feed_forward.1} parent=1 // pred_fallthru
      _
    // Predicated region
    $region42: #{feed_forward.1} parent=1 // pred_check
      _
    $region43: #{feed_forward.1} parent=1 // pred_check_branch
      %262 = sbr.rel (0) target = $region45
    $region44: #{feed_forward.1} parent=1 // pred_region
      %264 = vsyncadd [#allocation5], 0
      %s265 = sshll.u32 [#allocation9], 4
      %s266 = int_to_ptr.vmem [resolvable:$true] %s265
      %s267 = sshll.u32 %s5, 4
      %s268 = int_to_ptr.hbm [resolvable:$true] %s267
      %273 = dma.vmem_to_hbm [thread:$0]  %s266, 256, %s268, [#allocation5], 128, 128, 8
    $region45: #{feed_forward.1} parent=1 // pred_fallthru
      _
    // Predicated region
    $region46: #{feed_forward.1} parent=1 // pred_check
      _
    $region47: #{feed_forward.1} parent=1 // pred_check_branch
      %275 = sbr.rel (0) target = $region49
    $region48: #{feed_forward.1} parent=1 // pred_region
      %277 = dma.done [#allocation5], 256
    $region49: #{feed_forward.1} parent=1 // pred_fallthru
      _
    %278 = vsyncpa [#allocation4], 1
    %279 = vsyncpa [#allocation7], 1
    %280 = vsyncpa [#allocation5], 1

</llo_original>
